<compile_context>
chip_gen: v5e
topology: v5e:2x2
jax: 0.10.0
libtpu: 0.0.40
codegen_flags: <defaults>
</compile_context>

<pallas_src>
import math
from functools import partial

import jax
import jax.numpy as jnp
from jax.experimental import pallas as pl
from jax.experimental.pallas import tpu as pltpu


def _round_up(x, m):
    return ((x + m - 1) // m) * m


def _pick_tile(padded_dim, desired, *, prefer_split=False):
    """Largest multiple of 128 that divides `padded_dim` and is <= `desired`.

    `padded_dim` must be a multiple of 128.  With prefer_split=True the tile
    is also capped so the axis keeps >= 2 blocks whenever possible (keeps a
    'parallel' grid axis splittable across v7x's two TensorCores).
    """
    cap = min(desired, padded_dim)
    if prefer_split and padded_dim >= 256:
        cap = min(cap, padded_dim // 2)
    best, t = 128, 128
    while t <= cap:
        if padded_dim % t == 0:
            best = t
        t += 128
    return best


# --------------------------------------------------------------------------
# Stage 1: support = x @ weight   (small; no bias, no scratch)
# --------------------------------------------------------------------------
def _xw_kernel(x_ref, w_ref, o_ref):
    # Full F_in contraction in a single MXU dot; inputs cast to bf16 in-kernel
    # (no wrapper-level astype passes).
    o_ref[...] = jnp.dot(
        x_ref[...].astype(jnp.bfloat16),
        w_ref[...].astype(jnp.bfloat16),
        preferred_element_type=jnp.float32,
    ).astype(o_ref.dtype)


def _compute_support(x, weight, n_pad, f_out_pad, tn):
    """Returns pad(x) @ pad(weight) as bf16 with shape (n_pad, f_out_pad)."""
    n, f_in = x.shape
    f_out = weight.shape[1]
    # Only the *small* operands are padded: x rows to the adj-padded node
    # count (zero rows -> zero support rows) and weight/bias columns to 128.
    x_p = jnp.pad(x, ((0, n_pad - n), (0, 0))) if n_pad != n else x
    w_p = (jnp.pad(weight, ((0, 0), (0, f_out_pad - f_out)))
           if f_out_pad != f_out else weight)

    tm = _pick_tile(n_pad, 512)
    # TODO(synk): if F_in were very large (>~4k) the full-contraction block
    # should be split over a k grid axis; GCN feature dims make this moot.
    return pl.pallas_call(
        _xw_kernel,
        out_shape=jax.ShapeDtypeStruct((n_pad, f_out_pad), jnp.bfloat16),
        grid_spec=pltpu.PrefetchScalarGridSpec(
            num_scalar_prefetch=0,
            grid=(n_pad // tm, f_out_pad // tn),
            in_specs=[
                pl.BlockSpec((tm, f_in), lambda i, j: (i, 0)),
                pl.BlockSpec((f_in, tn), lambda i, j: (0, j)),
            ],
            out_specs=pl.BlockSpec((tm, tn), lambda i, j: (i, j)),
        ),
        compiler_params=pltpu.CompilerParams(
            dimension_semantics=("parallel", "parallel"),
        ),
    )(x_p, w_p)


# --------------------------------------------------------------------------
# Stage 2: out = adj @ support (+ bias)   (dominant, HBM-bound)
# --------------------------------------------------------------------------
def _adj_support_kernel(a_ref, s_ref, *rest, tk):
    """One (j, i, k) grid step of out = adj @ support (+ bias).

    `rest` is (bias_ref, o_ref) when bias is present, else (o_ref,).
    The output block index ignores k, so it stays VMEM-resident across the
    contraction and doubles as the f32 accumulator (no scratch, no epilogue).
    """
    if len(rest) == 2:
        b_ref, o_ref = rest
    else:
        b_ref, (o_ref,) = None, rest

    k = pl.program_id(2)

    @pl.when(k == 0)
    def _():
        if b_ref is None:
            o_ref[...] = jnp.zeros_like(o_ref)
        else:
            o_ref[...] = jnp.zeros_like(o_ref) + b_ref[...]  # bias broadcast

    start = pl.multiple_of(k * tk, tk)
    a_bf = a_ref[...].astype(jnp.bfloat16)      # cast adj tile in-kernel (VPU)
    s_bf = s_ref[pl.ds(start, tk), :]           # k-th panel of resident support
    o_ref[...] += jnp.dot(a_bf, s_bf, preferred_element_type=jnp.float32)


def _adj_times_support(adj, support_p, bias, n, f_out, *,
                       tm=None, tn=None, tk=None):
    n_pad, f_out_pad = support_p.shape

    tm = tm or _pick_tile(n_pad, 512, prefer_split=True)
    tk = tk or _pick_tile(n_pad, 1024)
    tn = tn or _pick_tile(f_out_pad, 512)

    # Pad adj only when N is not 128-aligned (zero extra columns keep the
    # contraction exact; extra output rows are sliced off below).
    adj_p = (jnp.pad(adj, ((0, n_pad - n), (0, n_pad - n)))
             if n_pad != n else adj)
    # TODO(synk): for N % 128 != 0 this still materializes one padded copy of
    # adj; in-kernel masking of the last partial tile would avoid it.

    in_specs = [
        pl.BlockSpec((tm, tk), lambda j, i, k: (i, k)),      # adj tile
        pl.BlockSpec((n_pad, tn), lambda j, i, k: (0, j)),   # resident support
    ]
    operands = [adj_p, support_p]
    if bias is not None:
        bias_p = bias.astype(jnp.float32).reshape(1, f_out)
        if f_out_pad != f_out:
            bias_p = jnp.pad(bias_p, ((0, 0), (0, f_out_pad - f_out)))
        in_specs.append(pl.BlockSpec((1, tn), lambda j, i, k: (0, j)))
        operands.append(bias_p)

    out_p = pl.pallas_call(
        partial(_adj_support_kernel, tk=tk),
        out_shape=jax.ShapeDtypeStruct((n_pad, f_out_pad), jnp.float32),
        grid_spec=pltpu.PrefetchScalarGridSpec(
            num_scalar_prefetch=0,
            grid=(f_out_pad // tn, n_pad // tm, n_pad // tk),   # (j, i, k)
            in_specs=in_specs,
            out_specs=pl.BlockSpec((tm, tn), lambda j, i, k: (i, j)),
        ),
        compiler_params=pltpu.CompilerParams(
            dimension_semantics=("parallel", "parallel", "arbitrary"),
            vmem_limit_bytes=48 * 1024 * 1024,   # room for resident support
        ),
    )(*operands)

    return out_p[:n, :f_out]


def graph_convolution(x, weight, adj, bias=None, *, tm=None, tn=None, tk=None):
    """GCN layer forward: adj @ (x @ weight) (+ bias), dense adjacency.

    x: [N, F_in], weight: [F_in, F_out], adj: [N, N], bias: [F_out] or None.
    For best performance across layers, store adj persistently in bf16; the
    kernel accepts either dtype and casts tiles in-kernel.
    """
    n, _ = x.shape
    f_out = weight.shape[1]
    assert adj.shape == (n, n), adj.shape

    n_pad = _round_up(n, 128)
    f_out_pad = _round_up(f_out, 128)
    tn_eff = tn or _pick_tile(f_out_pad, 512)

    # Stage 1 (cheap): support = X @ W, bf16, already padded for stage 2.
    support_p = _compute_support(x, weight, n_pad, f_out_pad, tn_eff)
    # Stage 2 (dominant): out = adj @ support + bias.
    return _adj_times_support(adj, support_p, bias, n, f_out,
                              tm=tm, tn=tn_eff, tk=tk)


if __name__ == "__main__":
    # Small shapes consistent with the module: N nodes, in -> out features.
    N, in_features, out_features = 256, 48, 96

    key = jax.random.PRNGKey(0)
    kx, ka, kw, kb = jax.random.split(key, 4)

    x = jax.random.normal(kx, (N, in_features), dtype=jnp.float32)

    # Dense row-normalized adjacency with self-loops (synthetic).
    a = (jax.random.uniform(ka, (N, N)) > 0.9).astype(jnp.float32)
    a = a + jnp.eye(N, dtype=jnp.float32)
    adj = a / jnp.sum(a, axis=1, keepdims=True)

    # reset_parameters_uniform(): stdv = 1/sqrt(out_features), U(-stdv, stdv).
    stdv = 1.0 / math.sqrt(out_features)
    weight = jax.random.uniform(kw, (in_features, out_features),
                                minval=-stdv, maxval=stdv, dtype=jnp.float32)
    bias = jax.random.uniform(kb, (out_features,),
                              minval=-stdv, maxval=stdv, dtype=jnp.float32)

    ref = adj @ (x @ weight) + bias

    # 1) Default (auto-picked) tiles.
    out = jax.block_until_ready(jax.jit(graph_convolution)(x, weight, adj, bias))
    assert out.shape == (N, out_features)
    assert jnp.allclose(out, ref, atol=2e-2, rtol=2e-2), "mismatch (auto tiles)"

    # 2) Forced small tiles -> exercises the multi-block reduction path
    #    (k grid > 1) and the resident-support pl.ds slicing.
    out_small = jax.block_until_ready(
        jax.jit(partial(graph_convolution, tm=128, tn=128, tk=128))(
            x, weight, adj, bias))
    assert jnp.allclose(out_small, ref, atol=2e-2, rtol=2e-2), \
        "mismatch (small tiles)"

    print("KERNEL_OK")
</pallas_src>

<mosaic_0001>
module attributes {stable_mosaic.version = 11 : i64} {
  func.func @_xw_kernel(%arg0: i32, %arg1: i32, %arg2: memref<256x48xf32, #tpu.memory_space<vmem>>, %arg3: memref<48x128xf32, #tpu.memory_space<vmem>>, %arg4: memref<256x128xbf16, #tpu.memory_space<vmem>>) attributes {dimension_semantics = [#tpu.dimension_semantics<parallel>, #tpu.dimension_semantics<parallel>], iteration_bounds = array<i64: 1, 1>, scalar_prefetch = 0 : i64, scratch_operands = 0 : i64, tpu.core_type = #tpu.core_type<tc>, window_params = [{transform_indices = @transform_0, window_bounds = array<i64: 256, 48>}, {transform_indices = @transform_1, window_bounds = array<i64: 48, 128>}, {transform_indices = @transform_2, window_bounds = array<i64: 256, 128>}]} {
    %c0 = arith.constant 0 : index
    %c0_0 = arith.constant 0 : index
    %0 = vector.load %arg2[%c0, %c0_0] : memref<256x48xf32, #tpu.memory_space<vmem>>, vector<256x48xf32>
    %1 = arith.truncf %0 : vector<256x48xf32> to vector<256x48xbf16>
    %c0_1 = arith.constant 0 : index
    %c0_2 = arith.constant 0 : index
    %2 = vector.load %arg3[%c0_1, %c0_2] : memref<48x128xf32, #tpu.memory_space<vmem>>, vector<48x128xf32>
    %3 = arith.truncf %2 : vector<48x128xf32> to vector<48x128xbf16>
    %cst = arith.constant dense<0.000000e+00> : vector<256x128xf32>
    %4 = tpu.matmul %1, %3, %cst {dimension_numbers = #tpu.dot_dimension_numbers<[1], [0], [0], [1], [0, 0, 1, 1], [], []>} : vector<256x48xbf16>, vector<48x128xbf16>, vector<256x128xf32> -> vector<256x128xf32>
    %5 = arith.truncf %4 : vector<256x128xf32> to vector<256x128xbf16>
    %c0_3 = arith.constant 0 : index
    %c0_4 = arith.constant 0 : index
    %6 = vector.load %arg4[%c0_3, %c0_4] : memref<256x128xbf16, #tpu.memory_space<vmem>>, vector<256x128xbf16>
    tpu.vector_store %arg4[%c0_3, %c0_4], %5 {strides = array<i32>} : memref<256x128xbf16, #tpu.memory_space<vmem>>, vector<256x128xbf16>,
    return
  }
  func.func @transform_0(%arg0: i32, %arg1: i32) -> (i32, i32) {
    %c0_i32 = arith.constant 0 : i32
    %c0_i32_0 = arith.constant 0 : i32
    return %arg0, %c0_i32 : i32, i32
  }
  func.func @transform_1(%arg0: i32, %arg1: i32) -> (i32, i32) {
    %c0_i32 = arith.constant 0 : i32
    %c0_i32_0 = arith.constant 0 : i32
    return %c0_i32, %arg1 : i32, i32
  }
  func.func @transform_2(%arg0: i32, %arg1: i32) -> (i32, i32) {
    %c0_i32 = arith.constant 0 : i32
    return %arg0, %arg1 : i32, i32
  }
}

module attributes {stable_mosaic.version = 11 : i64} {
  func.func @_adj_support_kernel(%arg0: i32, %arg1: i32, %arg2: i32, %arg3: memref<128x256xf32, #tpu.memory_space<vmem>>, %arg4: memref<256x128xbf16, #tpu.memory_space<vmem>>, %arg5: memref<1x128xf32, #tpu.memory_space<vmem>>, %arg6: memref<128x128xf32, #tpu.memory_space<vmem>>) attributes {dimension_semantics = [#tpu.dimension_semantics<parallel>, #tpu.dimension_semantics<parallel>, #tpu.dimension_semantics<arbitrary>], iteration_bounds = array<i64: 1, 2, 1>, scalar_prefetch = 0 : i64, scratch_operands = 0 : i64, tpu.core_type = #tpu.core_type<tc>, window_params = [{transform_indices = @transform_0, window_bounds = array<i64: 128, 256>}, {transform_indices = @transform_1, window_bounds = array<i64: 256, 128>}, {transform_indices = @transform_2, window_bounds = array<i64: 1, 128>}, {transform_indices = @transform_3, window_bounds = array<i64: 128, 128>}]} {
    %c0_i32 = arith.constant 0 : i32
    %0 = arith.cmpi eq, %arg2, %c0_i32 : i32
    %1 = arith.extui %0 : i1 to i32
    %c0_i32_0 = arith.constant 0 : i32
    %2 = arith.cmpi ne, %1, %c0_i32_0 : i32
    scf.if %2 {
      %cst_7 = arith.constant 0.000000e+00 : f32
      %13 = vector.broadcast %cst_7 : f32 to vector<128x128xf32>
      %c0_8 = arith.constant 0 : index
      %c0_9 = arith.constant 0 : index
      %14 = vector.load %arg5[%c0_8, %c0_9] : memref<1x128xf32, #tpu.memory_space<vmem>>, vector<1x128xf32>
      %15 = vector.broadcast %14 : vector<1x128xf32> to vector<128x128xf32>
      %16 = arith.addf %13, %15 : vector<128x128xf32>
      %c0_10 = arith.constant 0 : index
      %c0_11 = arith.constant 0 : index
      %17 = vector.load %arg6[%c0_10, %c0_11] : memref<128x128xf32, #tpu.memory_space<vmem>>, vector<128x128xf32>
      tpu.vector_store %arg6[%c0_10, %c0_11], %16 {strides = array<i32>} : memref<128x128xf32, #tpu.memory_space<vmem>>, vector<128x128xf32>,
    } else {
    }
    %c256_i32 = arith.constant 256 : i32
    %3 = arith.muli %arg2, %c256_i32 : i32
    %4 = tpu.assume_multiple %3, 256 : i32
    %c0 = arith.constant 0 : index
    %c0_1 = arith.constant 0 : index
    %5 = vector.load %arg3[%c0, %c0_1] : memref<128x256xf32, #tpu.memory_space<vmem>>, vector<128x256xf32>
    %6 = arith.truncf %5 : vector<128x256xf32> to vector<128x256xbf16>
    %7 = arith.index_cast %4 : i32 to index
    %c0_2 = arith.constant 0 : index
    %8 = vector.load %arg4[%7, %c0_2] : memref<256x128xbf16, #tpu.memory_space<vmem>>, vector<256x128xbf16>
    %c0_3 = arith.constant 0 : index
    %c0_4 = arith.constant 0 : index
    %9 = vector.load %arg6[%c0_3, %c0_4] : memref<128x128xf32, #tpu.memory_space<vmem>>, vector<128x128xf32>
    %cst = arith.constant dense<0.000000e+00> : vector<128x128xf32>
    %10 = tpu.matmul %6, %8, %cst {dimension_numbers = #tpu.dot_dimension_numbers<[1], [0], [0], [1], [0, 0, 1, 1], [], []>} : vector<128x256xbf16>, vector<256x128xbf16>, vector<128x128xf32> -> vector<128x128xf32>
    %11 = arith.addf %9, %10 : vector<128x128xf32>
    %c0_5 = arith.constant 0 : index
    %c0_6 = arith.constant 0 : index
    %12 = vector.load %arg6[%c0_5, %c0_6] : memref<128x128xf32, #tpu.memory_space<vmem>>, vector<128x128xf32>
    tpu.vector_store %arg6[%c0_5, %c0_6], %11 {strides = array<i32>} : memref<128x128xf32, #tpu.memory_space<vmem>>, vector<128x128xf32>,
    return
  }
  func.func @transform_0(%arg0: i32, %arg1: i32, %arg2: i32) -> (i32, i32) {
    %c0_i32 = arith.constant 0 : i32
    return %arg1, %arg2 : i32, i32
  }
  func.func @transform_1(%arg0: i32, %arg1: i32, %arg2: i32) -> (i32, i32) {
    %c0_i32 = arith.constant 0 : i32
    %c0_i32_0 = arith.constant 0 : i32
    return %c0_i32, %arg0 : i32, i32
  }
  func.func @transform_2(%arg0: i32, %arg1: i32, %arg2: i32) -> (i32, i32) {
    %c0_i32 = arith.constant 0 : i32
    %c0_i32_0 = arith.constant 0 : i32
    return %c0_i32, %arg0 : i32, i32
  }
  func.func @transform_3(%arg0: i32, %arg1: i32, %arg2: i32) -> (i32, i32) {
    %c0_i32 = arith.constant 0 : i32
    return %arg1, %arg0 : i32, i32
  }
}

</mosaic_0001>

<llo_original>
// kernel: graph_convolution.2
$region0: #{graph_convolution.2}
  #allocation0 [shape = 'u32[]', space=smem, size = 0x4, offset = 0x4, fixed_abs, tag = 'smem constant byte address 0x4 - core index']
  #allocation1 [shape = 'u32[72,128]{1,0:T(1,128)}', space=vmem, size = 0x9000, scoped, tag = 'internal scratch']
  %s0 = inlined_call_operand.vmem [shape: f32[256,48], index: 0, kind: input, shape index: {}]
  %s1 = inlined_call_operand.vmem [shape: f32[48,128], index: 1, kind: input, shape index: {}]
  %s2 = inlined_call_operand.vmem [shape: bf16[256,128], index: 2, kind: output, shape index: {}]
  %s3 = sld [smem:[#allocation0]]
  $region18: #{graph_convolution.2} parent=0
    _
  %s5 = ssub.s32 1, %s3
  %s6 = scalar_select 0, %s5, %s3
  // Predicated region
  $region2: #{graph_convolution.2} parent=0 // pred_check
    _
  $region3: #{graph_convolution.2} parent=0 // pred_check_branch
    %8 = sbr.rel (0) target = $region5
  $region4: #{graph_convolution.2} parent=0 // pred_region
    _
  $region5: #{graph_convolution.2} parent=0 // pred_fallthru
    _
  // Predicated region
  $region6: #{graph_convolution.2} parent=0 // pred_check
    _
  $region7: #{graph_convolution.2} parent=0 // pred_check_branch
    %10 = sbr.rel (0) target = $region9
  $region8: #{graph_convolution.2} parent=0 // pred_region
    _
  $region9: #{graph_convolution.2} parent=0 // pred_fallthru
    _
  %v12 = vld [vmem:[%s0] sm:$0xff]
  %v13 = vld [vmem:[%s0 + $0x8] sm:$0xff]
  %v14 = vld [vmem:[%s0 + $0x10] sm:$0xff]
  %v15 = vld [vmem:[%s0 + $0x18] sm:$0xff]
  %v16 = vld [vmem:[%s0 + $0x20] sm:$0xff]
  %v17 = vld [vmem:[%s0 + $0x28] sm:$0xff]
  %v18 = vld [vmem:[%s0 + $0x30] sm:$0xff]
  %v19 = vld [vmem:[%s0 + $0x38] sm:$0xff]
  %v20 = vld [vmem:[%s0 + $0x40] sm:$0xff]
  %v21 = vld [vmem:[%s0 + $0x48] sm:$0xff]
  %v22 = vld [vmem:[%s0 + $0x50] sm:$0xff]
  %v23 = vld [vmem:[%s0 + $0x58] sm:$0xff]
  %v24 = vld [vmem:[%s0 + $0x60] sm:$0xff]
  %v25 = vld [vmem:[%s0 + $0x68] sm:$0xff]
  %v26 = vld [vmem:[%s0 + $0x70] sm:$0xff]
  %v27 = vld [vmem:[%s0 + $0x78] sm:$0xff]
  %v28 = vld [vmem:[%s0 + $0x80] sm:$0xff]
  %v29 = vld [vmem:[%s0 + $0x88] sm:$0xff]
  %v30 = vld [vmem:[%s0 + $0x90] sm:$0xff]
  %v31 = vld [vmem:[%s0 + $0x98] sm:$0xff]
  %v32 = vld [vmem:[%s0 + $0xa0] sm:$0xff]
  %v33 = vld [vmem:[%s0 + $0xa8] sm:$0xff]
  %v34 = vld [vmem:[%s0 + $0xb0] sm:$0xff]
  %v35 = vld [vmem:[%s0 + $0xb8] sm:$0xff]
  %v36 = vld [vmem:[%s0 + $0xc0] sm:$0xff]
  %v37 = vld [vmem:[%s0 + $0xc8] sm:$0xff]
  %v38 = vld [vmem:[%s0 + $0xd0] sm:$0xff]
  %v39 = vld [vmem:[%s0 + $0xd8] sm:$0xff]
  %v40 = vld [vmem:[%s0 + $0xe0] sm:$0xff]
  %v41 = vld [vmem:[%s0 + $0xe8] sm:$0xff]
  %v42 = vld [vmem:[%s0 + $0xf0] sm:$0xff]
  %v43 = vld [vmem:[%s0 + $0xf8] sm:$0xff]
  %v44 = vpack.c.bf16 %v13, %v12
  %v45 = vpack.c.bf16 %v15, %v14
  %v46 = vpack.c.bf16 %v17, %v16
  %v47 = vpack.c.bf16 %v19, %v18
  %v48 = vpack.c.bf16 %v21, %v20
  %v49 = vpack.c.bf16 %v23, %v22
  %v50 = vpack.c.bf16 %v25, %v24
  %v51 = vpack.c.bf16 %v27, %v26
  %v52 = vpack.c.bf16 %v29, %v28
  %v53 = vpack.c.bf16 %v31, %v30
  %v54 = vpack.c.bf16 %v33, %v32
  %v55 = vpack.c.bf16 %v35, %v34
  %v56 = vpack.c.bf16 %v37, %v36
  %v57 = vpack.c.bf16 %v39, %v38
  %v58 = vpack.c.bf16 %v41, %v40
  %v59 = vpack.c.bf16 %v43, %v42
  %v60 = vld [vmem:[%s1] sm:$0xff]
  %v61 = vld [vmem:[%s1 + $0x8] sm:$0xff]
  %v62 = vld [vmem:[%s1 + $0x10] sm:$0xff]
  %v63 = vld [vmem:[%s1 + $0x18] sm:$0xff]
  %v64 = vld [vmem:[%s1 + $0x20] sm:$0xff]
  %v65 = vld [vmem:[%s1 + $0x28] sm:$0xff]
  %v66 = vpack.c.bf16 %v61, %v60
  %v67 = vpack.c.bf16 %v63, %v62
  %v68 = vpack.c.bf16 %v65, %v64
  %vm69 = vcmask 392192
  %v71 = vsel %vm69, %v44, 0
  %v74 = vsel %vm69, %v45, 0
  %v77 = vsel %vm69, %v46, 0
  %v80 = vsel %vm69, %v47, 0
  %v83 = vsel %vm69, %v48, 0
  %v86 = vsel %vm69, %v49, 0
  %v89 = vsel %vm69, %v50, 0
  %v92 = vsel %vm69, %v51, 0
  %v95 = vsel %vm69, %v52, 0
  %v98 = vsel %vm69, %v53, 0
  %v101 = vsel %vm69, %v54, 0
  %v104 = vsel %vm69, %v55, 0
  %v107 = vsel %vm69, %v56, 0
  %v110 = vsel %vm69, %v57, 0
  %v113 = vsel %vm69, %v58, 0
  %v116 = vsel %vm69, %v59, 0
  %118 = vmatpush.bf16.msra.mxu0 0
  %119 = vmatpush.bf16.msra.mxu0 0
  %120 = vmatpush.bf16.msra.mxu0 0
  %121 = vmatpush.bf16.msra.mxu0 0
  %122 = vmatpush.bf16.msra.mxu0 0
  %123 = vmatpush.bf16.msra.mxu0 %v68
  %124 = vmatpush.bf16.msra.mxu0 %v67
  %125 = vmatpush.bf16.msra.mxu0 %v66
  %126 = vmatmul.bf16.gmra.mxu0 %v71
  %v127 = vpop.f32.mrf.mxu0
  %v128 = vadd.f32 0.0, %v127
  %v129 = vpop.f32.mrf.mxu0
  %v130 = vadd.f32 0.0, %v129
  %131 = vmatmul.bf16.gmra.mxu0 %v74
  %v132 = vpop.f32.mrf.mxu0
  %v133 = vadd.f32 0.0, %v132
  %v134 = vpop.f32.mrf.mxu0
  %v135 = vadd.f32 0.0, %v134
  %136 = vmatmul.bf16.gmra.mxu0 %v77
  %v137 = vpop.f32.mrf.mxu0
  %v138 = vadd.f32 0.0, %v137
  %v139 = vpop.f32.mrf.mxu0
  %v140 = vadd.f32 0.0, %v139
  %141 = vmatmul.bf16.gmra.mxu0 %v80
  %v142 = vpop.f32.mrf.mxu0
  %v143 = vadd.f32 0.0, %v142
  %v144 = vpop.f32.mrf.mxu0
  %v145 = vadd.f32 0.0, %v144
  %146 = vmatmul.bf16.gmra.mxu0 %v83
  %v147 = vpop.f32.mrf.mxu0
  %v148 = vadd.f32 0.0, %v147
  %v149 = vpop.f32.mrf.mxu0
  %v150 = vadd.f32 0.0, %v149
  %151 = vmatmul.bf16.gmra.mxu0 %v86
  %v152 = vpop.f32.mrf.mxu0
  %v153 = vadd.f32 0.0, %v152
  %v154 = vpop.f32.mrf.mxu0
  %v155 = vadd.f32 0.0, %v154
  %156 = vmatmul.bf16.gmra.mxu0 %v89
  %v157 = vpop.f32.mrf.mxu0
  %v158 = vadd.f32 0.0, %v157
  %v159 = vpop.f32.mrf.mxu0
  %v160 = vadd.f32 0.0, %v159
  %161 = vmatmul.bf16.gmra.mxu0 %v92
  %v162 = vpop.f32.mrf.mxu0
  %v163 = vadd.f32 0.0, %v162
  %v164 = vpop.f32.mrf.mxu0
  %v165 = vadd.f32 0.0, %v164
  %166 = vmatmul.bf16.gmra.mxu0 %v95
  %v167 = vpop.f32.mrf.mxu0
  %v168 = vadd.f32 0.0, %v167
  %v169 = vpop.f32.mrf.mxu0
  %v170 = vadd.f32 0.0, %v169
  %171 = vmatmul.bf16.gmra.mxu0 %v98
  %v172 = vpop.f32.mrf.mxu0
  %v173 = vadd.f32 0.0, %v172
  %v174 = vpop.f32.mrf.mxu0
  %v175 = vadd.f32 0.0, %v174
  %176 = vmatmul.bf16.gmra.mxu0 %v101
  %v177 = vpop.f32.mrf.mxu0
  %v178 = vadd.f32 0.0, %v177
  %v179 = vpop.f32.mrf.mxu0
  %v180 = vadd.f32 0.0, %v179
  %181 = vmatmul.bf16.gmra.mxu0 %v104
  %v182 = vpop.f32.mrf.mxu0
  %v183 = vadd.f32 0.0, %v182
  %v184 = vpop.f32.mrf.mxu0
  %v185 = vadd.f32 0.0, %v184
  %186 = vmatmul.bf16.gmra.mxu0 %v107
  %v187 = vpop.f32.mrf.mxu0
  %v188 = vadd.f32 0.0, %v187
  %v189 = vpop.f32.mrf.mxu0
  %v190 = vadd.f32 0.0, %v189
  %191 = vmatmul.bf16.gmra.mxu0 %v110
  %v192 = vpop.f32.mrf.mxu0
  %v193 = vadd.f32 0.0, %v192
  %v194 = vpop.f32.mrf.mxu0
  %v195 = vadd.f32 0.0, %v194
  %196 = vmatmul.bf16.gmra.mxu0 %v113
  %v197 = vpop.f32.mrf.mxu0
  %v198 = vadd.f32 0.0, %v197
  %v199 = vpop.f32.mrf.mxu0
  %v200 = vadd.f32 0.0, %v199
  %201 = vmatmul.bf16.gmra.mxu0 %v116
  %v202 = vpop.f32.mrf.mxu0
  %v203 = vadd.f32 0.0, %v202
  %v204 = vpop.f32.mrf.mxu0
  %v205 = vadd.f32 0.0, %v204
  %206 = vdwg.mxu0
  %v207 = vpack.c.bf16 %v128, %v128
  %v208 = vpack.c.bf16 %v130, %v130
  %v209 = vpack.c.bf16 %v133, %v133
  %v210 = vpack.c.bf16 %v135, %v135
  %v211 = vpack.c.bf16 %v138, %v138
  %v212 = vpack.c.bf16 %v140, %v140
  %v213 = vpack.c.bf16 %v143, %v143
  %v214 = vpack.c.bf16 %v145, %v145
  %v215 = vpack.c.bf16 %v148, %v148
  %v216 = vpack.c.bf16 %v150, %v150
  %v217 = vpack.c.bf16 %v153, %v153
  %v218 = vpack.c.bf16 %v155, %v155
  %v219 = vpack.c.bf16 %v158, %v158
  %v220 = vpack.c.bf16 %v160, %v160
  %v221 = vpack.c.bf16 %v163, %v163
  %v222 = vpack.c.bf16 %v165, %v165
  %v223 = vpack.c.bf16 %v168, %v168
  %v224 = vpack.c.bf16 %v170, %v170
  %v225 = vpack.c.bf16 %v173, %v173
  %v226 = vpack.c.bf16 %v175, %v175
  %v227 = vpack.c.bf16 %v178, %v178
  %v228 = vpack.c.bf16 %v180, %v180
  %v229 = vpack.c.bf16 %v183, %v183
  %v230 = vpack.c.bf16 %v185, %v185
  %v231 = vpack.c.bf16 %v188, %v188
  %v232 = vpack.c.bf16 %v190, %v190
  %v233 = vpack.c.bf16 %v193, %v193
  %v234 = vpack.c.bf16 %v195, %v195
  %v235 = vpack.c.bf16 %v198, %v198
  %v236 = vpack.c.bf16 %v200, %v200
  %v237 = vpack.c.bf16 %v203, %v203
  %v238 = vpack.c.bf16 %v205, %v205
  %239 = vst [vmem:[%s2] sm:$0xf] %v207
  %240 = vst [vmem:[%s2 + $0x4] sm:$0xf] %v208
  %241 = vst [vmem:[%s2 + $0x8] sm:$0xf] %v209
  %242 = vst [vmem:[%s2 + $0xc] sm:$0xf] %v210
  %243 = vst [vmem:[%s2 + $0x10] sm:$0xf] %v211
  %244 = vst [vmem:[%s2 + $0x14] sm:$0xf] %v212
  %245 = vst [vmem:[%s2 + $0x18] sm:$0xf] %v213
  %246 = vst [vmem:[%s2 + $0x1c] sm:$0xf] %v214
  %247 = vst [vmem:[%s2 + $0x20] sm:$0xf] %v215
  %248 = vst [vmem:[%s2 + $0x24] sm:$0xf] %v216
  %249 = vst [vmem:[%s2 + $0x28] sm:$0xf] %v217
  %250 = vst [vmem:[%s2 + $0x2c] sm:$0xf] %v218
  %251 = vst [vmem:[%s2 + $0x30] sm:$0xf] %v219
  %252 = vst [vmem:[%s2 + $0x34] sm:$0xf] %v220
  %253 = vst [vmem:[%s2 + $0x38] sm:$0xf] %v221
  %254 = vst [vmem:[%s2 + $0x3c] sm:$0xf] %v222
  %255 = vst [vmem:[%s2 + $0x40] sm:$0xf] %v223
  %256 = vst [vmem:[%s2 + $0x44] sm:$0xf] %v224
  %257 = vst [vmem:[%s2 + $0x48] sm:$0xf] %v225
  %258 = vst [vmem:[%s2 + $0x4c] sm:$0xf] %v226
  %259 = vst [vmem:[%s2 + $0x50] sm:$0xf] %v227
  %260 = vst [vmem:[%s2 + $0x54] sm:$0xf] %v228
  %261 = vst [vmem:[%s2 + $0x58] sm:$0xf] %v229
  %262 = vst [vmem:[%s2 + $0x5c] sm:$0xf] %v230
  %263 = vst [vmem:[%s2 + $0x60] sm:$0xf] %v231
  %264 = vst [vmem:[%s2 + $0x64] sm:$0xf] %v232
  %265 = vst [vmem:[%s2 + $0x68] sm:$0xf] %v233
  %266 = vst [vmem:[%s2 + $0x6c] sm:$0xf] %v234
  %267 = vst [vmem:[%s2 + $0x70] sm:$0xf] %v235
  %268 = vst [vmem:[%s2 + $0x74] sm:$0xf] %v236
  %269 = vst [vmem:[%s2 + $0x78] sm:$0xf] %v237
  %270 = vst [vmem:[%s2 + $0x7c] sm:$0xf] %v238
  // Predicated region
  $region10: #{graph_convolution.2} parent=0 // pred_check
    _
  $region11: #{graph_convolution.2} parent=0 // pred_check_branch
    %272 = sbr.rel (0) target = $region13
  $region12: #{graph_convolution.2} parent=0 // pred_region
    _
  $region13: #{graph_convolution.2} parent=0 // pred_fallthru
    _
  // Predicated region
  $region14: #{graph_convolution.2} parent=0 // pred_check
    _
  $region15: #{graph_convolution.2} parent=0 // pred_check_branch
    %274 = sbr.rel (0) target = $region17
  $region16: #{graph_convolution.2} parent=0 // pred_region
    _
  $region17: #{graph_convolution.2} parent=0 // pred_fallthru
    _

// kernel: graph_convolution.3
$region0: #{graph_convolution.3}
  #allocation0 [shape = 'u32[]', space=smem, size = 0x4, offset = 0x4, fixed_abs, tag = 'smem constant byte address 0x4 - core index']
  #allocation1 [shape = 'u32[72,128]{1,0:T(1,128)}', space=vmem, size = 0x9000, scoped, tag = 'internal scratch']
  %s0 = inlined_call_operand.hbm [shape: f32[256,256], index: 0, kind: input, shape index: {}]
  %s1 = inlined_call_operand.vmem [shape: bf16[256,128], index: 1, kind: input, shape index: {}]
  %s2 = inlined_call_operand.vmem [shape: f32[1,128], index: 2, kind: input, shape index: {}]
  %s3 = inlined_call_operand.vmem [shape: f32[256,128], index: 3, kind: output, shape index: {}]
  %s4 = sld [smem:[#allocation0]]
  $region53: #{graph_convolution.3} parent=0
    _
  %s6 = ssub.s32 1, %s4
  %s7 = scalar_select 0, %s6, %s4
  $region1: #{graph_convolution.3} parent=0
    #allocation2 [shape = 'u8[262144]{0}', space=vmem, size = 0x40000, scoped, tag = 'input window, operand 0']
    #allocation3 [shape = 's32[2]{0}', space=sflag, size = 0x8, scoped, tag = 'scoped memory for graph_convolution.3']
    %8 = vsyncpa [#allocation3], 0
    %s9 = scalar_lea.sflag [#allocation3], 1
    %10 = vsyncpa %s9, 0
    loop: start=0, step=1, limit=4
    $region2: #{graph_convolution.3} parent=1 // loop_pre_header
      _
    $region3: #{graph_convolution.3} parent=1 // loop_header
      %s12 = sphi 0, %s16
      %p13 = scmp.ge.s32.totalorder %s12, 4
      %s19 = sphi 0, %s38
      %s20 = sphi 0, %s34
      %s21 = sphi 0, %s30
      %s22 = sphi 0, %s19
      %s23 = sphi 0, %s20
      %s24 = sphi 0, %s21
      %s25 = sphi 0, %s22
      %s26 = sphi 0, %s23
      %s27 = sphi 0, %s24
      %s43 = sphi 0, %s45
      %s46 = sphi 0, %s43
      %s47 = sphi 0, %s46
      %s63 = sphi 0, %s47
      %s69 = sphi 0, %s71
      %s72 = sphi 0, %s69
      %s73 = sphi 0, %s72
      %s89 = sphi 0, %s73
      %s95 = sphi 0, %s97
      %s98 = sphi 0, %s95
      %s99 = sphi 0, %s98
      %s115 = sphi 0, %s99
      %s123 = sphi 0, %s125
      %s126 = sphi 0, %s123
      %s127 = sphi 0, %s126
      %s143 = sphi 0, %s127
    $region4: #{graph_convolution.3} parent=1 // loop_header_branch
      %15 = sbr.rel (%p13) target = $region8
    $region5: #{graph_convolution.3} parent=1 // loop_body
      %s17 = ssub.s32 %s12, 1
      %s18 = ssub.s32 %s12, 2
      %s28 = sadd.s32 1, %s21
      %p29 = scmp.ge.s32.totalorder %s28, 1
      %s30 = scalar_select %p29, 0, %s28
      %s31 = sadd.s32 1, %s20
      %s32 = scalar_select %p29, %s31, %s20
      %p33 = scmp.ge.s32.totalorder %s32, 2
      %s34 = scalar_select %p33, 0, %s32
      %s35 = sadd.s32 1, %s19
      %s36 = scalar_select %p33, %s35, %s19
      %p37 = scmp.ge.s32.totalorder %s36, 1
      %s38 = scalar_select %p37, 0, %s36
      %s39 = ssub.s32 %s20, %s34
      %s40 = ssub.s32 %s21, %s30
      %s41 = sor.u32 %s39, %s40
      %p42 = scmp.eq.s32.totalorder %s41, 0
      %s44 = sadd.s32 %s43, 1
      %s45 = scalar_select %p42, %s43, %s44
      %p48 = pneg %p42
      %p49 = scmp.eq.s32.totalorder %s12, 1
      %p50 = por %p48, %p49
      %p51 = scmp.ne.s32.totalorder %s43, %s46
      %p52 = scmp.eq.s32.totalorder %s12, 0
      %p53 = por %p51, %p52
      %p54 = scmp.ne.s32.totalorder %s43, %s46
      %p55 = scmp.eq.s32.totalorder %s17, 1
      %p56 = por %p54, %p55
      %p57 = scmp.ne.s32.totalorder %s46, %s47
      %p58 = scmp.eq.s32.totalorder %s17, 0
      %p59 = por %p57, %p58
      %p60 = scmp.ne.s32.totalorder %s46, %s47
      %p61 = scmp.eq.s32.totalorder %s18, 1
      %p62 = por %p60, %p61
      %p64 = scmp.ne.s32.totalorder %s47, %s63
      %p65 = scmp.eq.s32.totalorder %s18, 0
      %p66 = por %p64, %p65
      %s67 = ssub.s32 %s19, %s38
      %p68 = scmp.eq.s32.totalorder %s67, 0
      %s70 = sadd.s32 %s69, 1
      %s71 = scalar_select %p68, %s69, %s70
      %p74 = pneg %p68
      %p75 = scmp.eq.s32.totalorder %s12, 1
      %p76 = por %p74, %p75
      %p77 = scmp.ne.s32.totalorder %s69, %s72
      %p78 = scmp.eq.s32.totalorder %s12, 0
      %p79 = por %p77, %p78
      %p80 = scmp.ne.s32.totalorder %s69, %s72
      %p81 = scmp.eq.s32.totalorder %s17, 1
      %p82 = por %p80, %p81
      %p83 = scmp.ne.s32.totalorder %s72, %s73
      %p84 = scmp.eq.s32.totalorder %s17, 0
      %p85 = por %p83, %p84
      %p86 = scmp.ne.s32.totalorder %s72, %s73
      %p87 = scmp.eq.s32.totalorder %s18, 1
      %p88 = por %p86, %p87
      %p90 = scmp.ne.s32.totalorder %s73, %s89
      %p91 = scmp.eq.s32.totalorder %s18, 0
      %p92 = por %p90, %p91
      %s93 = ssub.s32 %s19, %s38
      %p94 = scmp.eq.s32.totalorder %s93, 0
      %s96 = sadd.s32 %s95, 1
      %s97 = scalar_select %p94, %s95, %s96
      %p100 = pneg %p94
      %p101 = scmp.eq.s32.totalorder %s12, 1
      %p102 = por %p100, %p101
      %p103 = scmp.ne.s32.totalorder %s95, %s98
      %p104 = scmp.eq.s32.totalorder %s12, 0
      %p105 = por %p103, %p104
      %p106 = scmp.ne.s32.totalorder %s95, %s98
      %p107 = scmp.eq.s32.totalorder %s17, 1
      %p108 = por %p106, %p107
      %p109 = scmp.ne.s32.totalorder %s98, %s99
      %p110 = scmp.eq.s32.totalorder %s17, 0
      %p111 = por %p109, %p110
      %p112 = scmp.ne.s32.totalorder %s98, %s99
      %p113 = scmp.eq.s32.totalorder %s18, 1
      %p114 = por %p112, %p113
      %p116 = scmp.ne.s32.totalorder %s99, %s115
      %p117 = scmp.eq.s32.totalorder %s18, 0
      %p118 = por %p116, %p117
      %s119 = ssub.s32 %s20, %s34
      %s120 = ssub.s32 %s19, %s38
      %s121 = sor.u32 %s119, %s120
      %p122 = scmp.eq.s32.totalorder %s121, 0
      %s124 = sadd.s32 %s123, 1
      %s125 = scalar_select %p122, %s123, %s124
      %p128 = pneg %p122
      %p129 = scmp.eq.s32.totalorder %s12, 1
      %p130 = por %p128, %p129
      %p131 = scmp.ne.s32.totalorder %s123, %s126
      %p132 = scmp.eq.s32.totalorder %s12, 0
      %p133 = por %p131, %p132
      %p134 = scmp.ne.s32.totalorder %s123, %s126
      %p135 = scmp.eq.s32.totalorder %s17, 1
      %p136 = por %p134, %p135
      %p137 = scmp.ne.s32.totalorder %s126, %s127
      %p138 = scmp.eq.s32.totalorder %s17, 0
      %p139 = por %p137, %p138
      %p140 = scmp.ne.s32.totalorder %s126, %s127
      %p141 = scmp.eq.s32.totalorder %s18, 1
      %p142 = por %p140, %p141
      %p144 = scmp.ne.s32.totalorder %s127, %s143
      %p145 = scmp.eq.s32.totalorder %s18, 0
      %p146 = por %p144, %p145
      %p147 = scmp.le.s32.totalorder 1, %s12
      %p148 = scmp.lt.s32.totalorder %s12, 3
      %p149 = pnand %p147, %p148
      %p150 = pneg %p149
      // Predicated region
      $region9: #{graph_convolution.3} parent=5 // pred_check
        _
      $region10: #{graph_convolution.3} parent=5 // pred_check_branch
        %152 = sbr.rel (%p149) target = $region12
      $region11: #{graph_convolution.3} parent=5 // pred_region
        %s153 = ssub.s32 %s12, 1
        // Predicated region
        $region13: #{graph_convolution.3} parent=11 // pred_check
          %p154 = pneg %p85
        $region14: #{graph_convolution.3} parent=11 // pred_check_branch
          %156 = sbr.rel (%p154) target = $region16
        $region15: #{graph_convolution.3} parent=11 // pred_region
          %p157 = scmp.lt.s32.totalorder %s22, 0
          %s158 = scalar_select %p157, %s22, 0
          %s159 = smul.addr %s158, 4
          %s160 = scalar_lea.vmem %s1, %s159
        $region16: #{graph_convolution.3} parent=11 // pred_fallthru
          _
        // Predicated region
        $region17: #{graph_convolution.3} parent=11 // pred_check
          %p161 = pneg %p111
        $region18: #{graph_convolution.3} parent=11 // pred_check_branch
          %163 = sbr.rel (%p161) target = $region20
        $region19: #{graph_convolution.3} parent=11 // pred_region
          %p164 = scmp.lt.s32.totalorder %s22, 0
          %s165 = scalar_select %p164, %s22, 0
          %s166 = scalar_lea.vmem %s2, %s165
        $region20: #{graph_convolution.3} parent=11 // pred_fallthru
          _
      $region12: #{graph_convolution.3} parent=5 // pred_fallthru
        _
      %p167 = scmp.lt.s32.totalorder %s12, 2
      // Predicated region
      $region21: #{graph_convolution.3} parent=5 // pred_check
        %p168 = pneg %p167
      $region22: #{graph_convolution.3} parent=5 // pred_check_branch
        %170 = sbr.rel (%p168) target = $region24
      $region23: #{graph_convolution.3} parent=5 // pred_region
        // Predicated region
        $region25: #{graph_convolution.3} parent=23 // pred_check
          %p171 = pneg %p53
        $region26: #{graph_convolution.3} parent=23 // pred_check_branch
          %173 = sbr.rel (%p171) target = $region28
        $region27: #{graph_convolution.3} parent=23 // pred_region
          %s174 = sand.u32 %s43, 1
          %s175 = scalar_lea.sflag [#allocation3], %s174
          %s176 = sand.u32 %s43, 1
          %s177 = smul.addr %s176, 256
          %s178 = scalar_lea.vmem [#allocation2], %s177
          %s179 = smul.u32 16, %s20
          %s180 = smul.u32 2, %s21
          %182 = vsyncadd %s175, 0
          %s183 = smul.addr %s179, 2
          %s184 = sadd.s32 %s180, %s183
          %s185 = smul.addr %s184, 8
          %s186 = scalar_lea.hbm %s0, %s185
          %s187 = sshll.u32 %s186, 4
          %s188 = int_to_ptr.hbm [resolvable:$true] %s187
          %s189 = sshll.u32 %s178, 4
          %s190 = int_to_ptr.vmem [resolvable:$true] %s189
          %195 = dma.hbm_to_vmem [thread:$0]  %s188, 4096, %s190, %s175, 256, 256, 16
        $region28: #{graph_convolution.3} parent=23 // pred_fallthru
          _
      $region24: #{graph_convolution.3} parent=5 // pred_fallthru
        _
      %p196 = scmp.le.s32.totalorder 1, %s12
      %p197 = scmp.lt.s32.totalorder %s12, 3
      %p198 = pnand %p196, %p197
      %p199 = pneg %p198
      // Predicated region
      $region29: #{graph_convolution.3} parent=5 // pred_check
        _
      $region30: #{graph_convolution.3} parent=5 // pred_check_branch
        %201 = sbr.rel (%p198) target = $region32
      $region31: #{graph_convolution.3} parent=5 // pred_region
        %s202 = ssub.s32 %s12, 1
        %s203 = sand.u32 %s46, 1
        %s204 = scalar_lea.sflag [#allocation3], %s203
        %s205 = sand.u32 %s46, 1
        %s206 = smul.addr %s205, 256
        %s207 = scalar_lea.vmem [#allocation2], %s206
        // Predicated region
        $region33: #{graph_convolution.3} parent=31 // pred_check
          %p208 = pneg %p59
        $region34: #{graph_convolution.3} parent=31 // pred_check_branch
          %210 = sbr.rel (%p208) target = $region36
        $region35: #{graph_convolution.3} parent=31 // pred_region
          %212 = dma.done %s204, 4096
        $region36: #{graph_convolution.3} parent=31 // pred_fallthru
          _
        %s213 = sand.u32 %s46, 1
        %s214 = scalar_lea.sflag [#allocation3], %s213
        %s215 = sand.u32 %s46, 1
        %s216 = smul.addr %s215, 256
        %s217 = scalar_lea.vmem [#allocation2], %s216
        %p218 = pneg %p59
        %p219 = pneg %p56
        %p220 = scmp.lt.s32.totalorder %s22, 0
        %s221 = scalar_select %p220, %s22, 0
        %s222 = smul.addr %s221, 4
        %s223 = scalar_lea.vmem %s1, %s222
        %p224 = pneg %p85
        %p225 = pneg %p82
        %p226 = scmp.lt.s32.totalorder %s22, 0
        %s227 = scalar_select %p226, %s22, 0
        %s228 = scalar_lea.vmem %s2, %s227
        %p229 = pneg %p111
        %p230 = pneg %p108
        %p231 = pneg %p139
        %p232 = pneg %p136
        %s233 = smul.u32 16, %s23
        %p234 = scmp.lt.s32.totalorder %s233, 31
        %s235 = scalar_select %p234, %s233, 31
        %p236 = scmp.lt.s32.totalorder %s22, 0
        %s237 = scalar_select %p236, %s22, 0
        %s238 = sadd.s32 %s237, %s235
        %s239 = smul.addr %s238, 8
        %s240 = scalar_lea.vmem %s3, %s239
        %s241 = smul.u32 16, %s23
        %s242 = smul.u32 2, %s24
        %p243 = scmp.lt.s32.totalorder %s22, 0
        %s244 = scalar_select %p243, %s22, 0
        %s245 = smul.addr %s244, 4
        %s246 = scalar_lea.vmem %s1, %s245
        %p247 = scmp.lt.s32.totalorder %s22, 0
        %s248 = scalar_select %p247, %s22, 0
        %s249 = scalar_lea.vmem %s2, %s248
        %s250 = smul.u32 16, %s23
        %p251 = scmp.lt.s32.totalorder %s250, 31
        %s252 = scalar_select %p251, %s250, 31
        %p253 = scmp.lt.s32.totalorder %s22, 0
        %s254 = scalar_select %p253, %s22, 0
        %s255 = sadd.s32 %s254, %s252
        %s256 = smul.addr %s255, 8
        %s257 = scalar_lea.vmem %s3, %s256
        %s258 = smul.u32 16, %s23
        %p259 = scmp.eq.s32.totalorder %s24, 0
        // Predicated region
        $region37: #{graph_convolution.3} parent=31 // pred_check
          %p260 = pneg %p259
        $region38: #{graph_convolution.3} parent=31 // pred_check_branch
          %262 = sbr.rel (%p260) target = $region40
        $region39: #{graph_convolution.3} parent=31 // pred_region
          %v263 = vld [vmem:[%s249] sm:$0x1]
          %v265 = vperm.slane %v263, 0
          %v267 = vadd.f32 %v265, 0.0
          %268 = vst [vmem:[%s257] sm:$0xff] %v267
          %269 = vst [vmem:[%s257 + $0x8] sm:$0xff] %v267
          %270 = vst [vmem:[%s257 + $0x10] sm:$0xff] %v267
          %271 = vst [vmem:[%s257 + $0x18] sm:$0xff] %v267
          %272 = vst [vmem:[%s257 + $0x20] sm:$0xff] %v267
          %273 = vst [vmem:[%s257 + $0x28] sm:$0xff] %v267
          %274 = vst [vmem:[%s257 + $0x30] sm:$0xff] %v267
          %275 = vst [vmem:[%s257 + $0x38] sm:$0xff] %v267
          %276 = vst [vmem:[%s257 + $0x40] sm:$0xff] %v267
          %277 = vst [vmem:[%s257 + $0x48] sm:$0xff] %v267
          %278 = vst [vmem:[%s257 + $0x50] sm:$0xff] %v267
          %279 = vst [vmem:[%s257 + $0x58] sm:$0xff] %v267
          %280 = vst [vmem:[%s257 + $0x60] sm:$0xff] %v267
          %281 = vst [vmem:[%s257 + $0x68] sm:$0xff] %v267
          %282 = vst [vmem:[%s257 + $0x70] sm:$0xff] %v267
          %283 = vst [vmem:[%s257 + $0x78] sm:$0xff] %v267
        $region40: #{graph_convolution.3} parent=31 // pred_fallthru
          _
        %s284 = smul.u32 %s24, 256
        %v285 = vld [vmem:[%s207] sm:$0xff]
        %v286 = vld [vmem:[%s207 + $0x8] sm:$0xff]
        %v287 = vld [vmem:[%s207 + $0x10] sm:$0xff]
        %v288 = vld [vmem:[%s207 + $0x18] sm:$0xff]
        %v289 = vld [vmem:[%s207 + $0x20] sm:$0xff]
        %v290 = vld [vmem:[%s207 + $0x28] sm:$0xff]
        %v291 = vld [vmem:[%s207 + $0x30] sm:$0xff]
        %v292 = vld [vmem:[%s207 + $0x38] sm:$0xff]
        %v293 = vld [vmem:[%s207 + $0x40] sm:$0xff]
        %v294 = vld [vmem:[%s207 + $0x48] sm:$0xff]
        %v295 = vld [vmem:[%s207 + $0x50] sm:$0xff]
        %v296 = vld [vmem:[%s207 + $0x58] sm:$0xff]
        %v297 = vld [vmem:[%s207 + $0x60] sm:$0xff]
        %v298 = vld [vmem:[%s207 + $0x68] sm:$0xff]
        %v299 = vld [vmem:[%s207 + $0x70] sm:$0xff]
        %v300 = vld [vmem:[%s207 + $0x78] sm:$0xff]
        %v301 = vld [vmem:[%s207 + $0x80] sm:$0xff]
        %v302 = vld [vmem:[%s207 + $0x88] sm:$0xff]
        %v303 = vld [vmem:[%s207 + $0x90] sm:$0xff]
        %v304 = vld [vmem:[%s207 + $0x98] sm:$0xff]
        %v305 = vld [vmem:[%s207 + $0xa0] sm:$0xff]
        %v306 = vld [vmem:[%s207 + $0xa8] sm:$0xff]
        %v307 = vld [vmem:[%s207 + $0xb0] sm:$0xff]
        %v308 = vld [vmem:[%s207 + $0xb8] sm:$0xff]
        %v309 = vld [vmem:[%s207 + $0xc0] sm:$0xff]
        %v310 = vld [vmem:[%s207 + $0xc8] sm:$0xff]
        %v311 = vld [vmem:[%s207 + $0xd0] sm:$0xff]
        %v312 = vld [vmem:[%s207 + $0xd8] sm:$0xff]
        %v313 = vld [vmem:[%s207 + $0xe0] sm:$0xff]
        %v314 = vld [vmem:[%s207 + $0xe8] sm:$0xff]
        %v315 = vld [vmem:[%s207 + $0xf0] sm:$0xff]
        %v316 = vld [vmem:[%s207 + $0xf8] sm:$0xff]
        %v317 = vpack.c.bf16 %v287, %v285
        %v318 = vpack.c.bf16 %v288, %v286
        %v319 = vpack.c.bf16 %v291, %v289
        %v320 = vpack.c.bf16 %v292, %v290
        %v321 = vpack.c.bf16 %v295, %v293
        %v322 = vpack.c.bf16 %v296, %v294
        %v323 = vpack.c.bf16 %v299, %v297
        %v324 = vpack.c.bf16 %v300, %v298
        %v325 = vpack.c.bf16 %v303, %v301
        %v326 = vpack.c.bf16 %v304, %v302
        %v327 = vpack.c.bf16 %v307, %v305
        %v328 = vpack.c.bf16 %v308, %v306
        %v329 = vpack.c.bf16 %v311, %v309
        %v330 = vpack.c.bf16 %v312, %v310
        %v331 = vpack.c.bf16 %v315, %v313
        %v332 = vpack.c.bf16 %v316, %v314
        %s333 = sshra.s32 %s284, 3
        %s334 = sand.u32 %s284, 7
        %s335 = smul.addr %s333, 4
        %s336 = scalar_lea.vmem %s246, %s335
        %v337 = vld [vmem:[%s336] sm:$0xf]
        %v338 = vld [vmem:[%s336 + $0x4] sm:$0xf]
        %v339 = vld [vmem:[%s336 + $0x8] sm:$0xf]
        %v340 = vld [vmem:[%s336 + $0xc] sm:$0xf]
        %v341 = vld [vmem:[%s336 + $0x10] sm:$0xf]
        %v342 = vld [vmem:[%s336 + $0x14] sm:$0xf]
        %v343 = vld [vmem:[%s336 + $0x18] sm:$0xf]
        %v344 = vld [vmem:[%s336 + $0x1c] sm:$0xf]
        %v345 = vld [vmem:[%s336 + $0x20] sm:$0xf]
        %v346 = vld [vmem:[%s336 + $0x24] sm:$0xf]
        %v347 = vld [vmem:[%s336 + $0x28] sm:$0xf]
        %v348 = vld [vmem:[%s336 + $0x2c] sm:$0xf]
        %v349 = vld [vmem:[%s336 + $0x30] sm:$0xf]
        %v350 = vld [vmem:[%s336 + $0x34] sm:$0xf]
        %v351 = vld [vmem:[%s336 + $0x38] sm:$0xf]
        %v352 = vld [vmem:[%s336 + $0x3c] sm:$0xf]
        %v353 = vld [vmem:[%s336 + $0x40] sm:$0xf]
        %v354 = vld [vmem:[%s336 + $0x44] sm:$0xf]
        %v355 = vld [vmem:[%s336 + $0x48] sm:$0xf]
        %v356 = vld [vmem:[%s336 + $0x4c] sm:$0xf]
        %v357 = vld [vmem:[%s336 + $0x50] sm:$0xf]
        %v358 = vld [vmem:[%s336 + $0x54] sm:$0xf]
        %v359 = vld [vmem:[%s336 + $0x58] sm:$0xf]
        %v360 = vld [vmem:[%s336 + $0x5c] sm:$0xf]
        %v361 = vld [vmem:[%s336 + $0x60] sm:$0xf]
        %v362 = vld [vmem:[%s336 + $0x64] sm:$0xf]
        %v363 = vld [vmem:[%s336 + $0x68] sm:$0xf]
        %v364 = vld [vmem:[%s336 + $0x6c] sm:$0xf]
        %v365 = vld [vmem:[%s336 + $0x70] sm:$0xf]
        %v366 = vld [vmem:[%s336 + $0x74] sm:$0xf]
        %v367 = vld [vmem:[%s336 + $0x78] sm:$0xf]
        %v368 = vld [vmem:[%s336 + $0x7c] sm:$0xf]
        %v369 = vld [vmem:[%s257] sm:$0xff]
        %v370 = vld [vmem:[%s257 + $0x8] sm:$0xff]
        %v371 = vld [vmem:[%s257 + $0x10] sm:$0xff]
        %v372 = vld [vmem:[%s257 + $0x18] sm:$0xff]
        %v373 = vld [vmem:[%s257 + $0x20] sm:$0xff]
        %v374 = vld [vmem:[%s257 + $0x28] sm:$0xff]
        %v375 = vld [vmem:[%s257 + $0x30] sm:$0xff]
        %v376 = vld [vmem:[%s257 + $0x38] sm:$0xff]
        %v377 = vld [vmem:[%s257 + $0x40] sm:$0xff]
        %v378 = vld [vmem:[%s257 + $0x48] sm:$0xff]
        %v379 = vld [vmem:[%s257 + $0x50] sm:$0xff]
        %v380 = vld [vmem:[%s257 + $0x58] sm:$0xff]
        %v381 = vld [vmem:[%s257 + $0x60] sm:$0xff]
        %v382 = vld [vmem:[%s257 + $0x68] sm:$0xff]
        %v383 = vld [vmem:[%s257 + $0x70] sm:$0xff]
        %v384 = vld [vmem:[%s257 + $0x78] sm:$0xff]
        %v417 = vunpack.c.l.b16 %v337
        %v418 = vunpack.c.l.b16 %v338
        %v419 = vunpack.c.l.b16 %v339
        %v420 = vunpack.c.l.b16 %v340
        %v421 = vunpack.c.l.b16 %v341
        %v422 = vunpack.c.l.b16 %v342
        %v423 = vunpack.c.l.b16 %v343
        %v424 = vunpack.c.l.b16 %v344
        %v425 = vunpack.c.l.b16 %v345
        %v426 = vunpack.c.l.b16 %v346
        %v427 = vunpack.c.l.b16 %v347
        %v428 = vunpack.c.l.b16 %v348
        %v429 = vunpack.c.l.b16 %v349
        %v430 = vunpack.c.l.b16 %v350
        %v431 = vunpack.c.l.b16 %v351
        %v432 = vunpack.c.l.b16 %v352
        %v433 = vunpack.c.l.b16 %v353
        %v434 = vunpack.c.l.b16 %v354
        %v435 = vunpack.c.l.b16 %v355
        %v436 = vunpack.c.l.b16 %v356
        %v437 = vunpack.c.l.b16 %v357
        %v438 = vunpack.c.l.b16 %v358
        %v439 = vunpack.c.l.b16 %v359
        %v440 = vunpack.c.l.b16 %v360
        %v441 = vunpack.c.l.b16 %v361
        %v442 = vunpack.c.l.b16 %v362
        %v443 = vunpack.c.l.b16 %v363
        %v444 = vunpack.c.l.b16 %v364
        %v445 = vunpack.c.l.b16 %v365
        %v446 = vunpack.c.l.b16 %v366
        %v447 = vunpack.c.l.b16 %v367
        %v448 = vunpack.c.l.b16 %v368
        %v449 = vpack.c.b16 %v418, %v417
        %v450 = vpack.c.b16 %v420, %v419
        %v451 = vpack.c.b16 %v422, %v421
        %v452 = vpack.c.b16 %v424, %v423
        %v453 = vpack.c.b16 %v426, %v425
        %v454 = vpack.c.b16 %v428, %v427
        %v455 = vpack.c.b16 %v430, %v429
        %v456 = vpack.c.b16 %v432, %v431
        %v457 = vpack.c.b16 %v434, %v433
        %v458 = vpack.c.b16 %v436, %v435
        %v459 = vpack.c.b16 %v438, %v437
        %v460 = vpack.c.b16 %v440, %v439
        %v461 = vpack.c.b16 %v442, %v441
        %v462 = vpack.c.b16 %v444, %v443
        %v463 = vpack.c.b16 %v446, %v445
        %v464 = vpack.c.b16 %v448, %v447
        %481 = vmatpush.bf16.msra.mxu0 %v456
        %482 = vmatpush.bf16.msra.mxu0 %v455
        %483 = vmatpush.bf16.msra.mxu0 %v454
        %484 = vmatpush.bf16.msra.mxu0 %v453
        %485 = vmatpush.bf16.msra.mxu0 %v452
        %486 = vmatpush.bf16.msra.mxu0 %v451
        %487 = vmatpush.bf16.msra.mxu0 %v450
        %488 = vmatpush.bf16.msra.mxu0 %v449
        %489 = vmatmul.bf16.gmra.mxu0 %v317
        %v490 = vpop.f32.mrf.mxu0
        %v491 = vadd.f32 0.0, %v490
        %v492 = vpop.f32.mrf.mxu0
        %v493 = vadd.f32 0.0, %v492
        %494 = vmatmul.bf16.gmra.mxu0 %v319
        %v495 = vpop.f32.mrf.mxu0
        %v496 = vadd.f32 0.0, %v495
        %v497 = vpop.f32.mrf.mxu0
        %v498 = vadd.f32 0.0, %v497
        %499 = vmatmul.bf16.gmra.mxu0 %v321
        %v500 = vpop.f32.mrf.mxu0
        %v501 = vadd.f32 0.0, %v500
        %v502 = vpop.f32.mrf.mxu0
        %v503 = vadd.f32 0.0, %v502
        %504 = vmatmul.bf16.gmra.mxu0 %v323
        %v505 = vpop.f32.mrf.mxu0
        %v506 = vadd.f32 0.0, %v505
        %v507 = vpop.f32.mrf.mxu0
        %v508 = vadd.f32 0.0, %v507
        %509 = vmatmul.bf16.gmra.mxu0 %v325
        %v510 = vpop.f32.mrf.mxu0
        %v511 = vadd.f32 0.0, %v510
        %v512 = vpop.f32.mrf.mxu0
        %v513 = vadd.f32 0.0, %v512
        %514 = vmatmul.bf16.gmra.mxu0 %v327
        %v515 = vpop.f32.mrf.mxu0
        %v516 = vadd.f32 0.0, %v515
        %v517 = vpop.f32.mrf.mxu0
        %v518 = vadd.f32 0.0, %v517
        %519 = vmatmul.bf16.gmra.mxu0 %v329
        %v520 = vpop.f32.mrf.mxu0
        %v521 = vadd.f32 0.0, %v520
        %v522 = vpop.f32.mrf.mxu0
        %v523 = vadd.f32 0.0, %v522
        %524 = vmatmul.bf16.gmra.mxu0 %v331
        %v525 = vpop.f32.mrf.mxu0
        %v526 = vadd.f32 0.0, %v525
        %v527 = vpop.f32.mrf.mxu0
        %v528 = vadd.f32 0.0, %v527
        %529 = vdwg.mxu0
        %530 = vmatpush.bf16.msra.mxu0 %v464
        %531 = vmatpush.bf16.msra.mxu0 %v463
        %532 = vmatpush.bf16.msra.mxu0 %v462
        %533 = vmatpush.bf16.msra.mxu0 %v461
        %534 = vmatpush.bf16.msra.mxu0 %v460
        %535 = vmatpush.bf16.msra.mxu0 %v459
        %536 = vmatpush.bf16.msra.mxu0 %v458
        %537 = vmatpush.bf16.msra.mxu0 %v457
        %538 = vmatmul.bf16.gmra.mxu0 %v318
        %v539 = vpop.f32.mrf.mxu0
        %v540 = vadd.f32 %v491, %v539
        %v541 = vpop.f32.mrf.mxu0
        %v542 = vadd.f32 %v493, %v541
        %543 = vmatmul.bf16.gmra.mxu0 %v320
        %v544 = vpop.f32.mrf.mxu0
        %v545 = vadd.f32 %v496, %v544
        %v546 = vpop.f32.mrf.mxu0
        %v547 = vadd.f32 %v498, %v546
        %548 = vmatmul.bf16.gmra.mxu0 %v322
        %v549 = vpop.f32.mrf.mxu0
        %v550 = vadd.f32 %v501, %v549
        %v551 = vpop.f32.mrf.mxu0
        %v552 = vadd.f32 %v503, %v551
        %553 = vmatmul.bf16.gmra.mxu0 %v324
        %v554 = vpop.f32.mrf.mxu0
        %v555 = vadd.f32 %v506, %v554
        %v556 = vpop.f32.mrf.mxu0
        %v557 = vadd.f32 %v508, %v556
        %558 = vmatmul.bf16.gmra.mxu0 %v326
        %v559 = vpop.f32.mrf.mxu0
        %v560 = vadd.f32 %v511, %v559
        %v561 = vpop.f32.mrf.mxu0
        %v562 = vadd.f32 %v513, %v561
        %563 = vmatmul.bf16.gmra.mxu0 %v328
        %v564 = vpop.f32.mrf.mxu0
        %v565 = vadd.f32 %v516, %v564
        %v566 = vpop.f32.mrf.mxu0
        %v567 = vadd.f32 %v518, %v566
        %568 = vmatmul.bf16.gmra.mxu0 %v330
        %v569 = vpop.f32.mrf.mxu0
        %v570 = vadd.f32 %v521, %v569
        %v571 = vpop.f32.mrf.mxu0
        %v572 = vadd.f32 %v523, %v571
        %573 = vmatmul.bf16.gmra.mxu0 %v332
        %v574 = vpop.f32.mrf.mxu0
        %v575 = vadd.f32 %v526, %v574
        %v576 = vpop.f32.mrf.mxu0
        %v577 = vadd.f32 %v528, %v576
        %578 = vdwg.mxu0
        %v579 = vadd.f32 %v369, %v540
        %v580 = vadd.f32 %v370, %v542
        %v581 = vadd.f32 %v371, %v545
        %v582 = vadd.f32 %v372, %v547
        %v583 = vadd.f32 %v373, %v550
        %v584 = vadd.f32 %v374, %v552
        %v585 = vadd.f32 %v375, %v555
        %v586 = vadd.f32 %v376, %v557
        %v587 = vadd.f32 %v377, %v560
        %v588 = vadd.f32 %v378, %v562
        %v589 = vadd.f32 %v379, %v565
        %v590 = vadd.f32 %v380, %v567
        %v591 = vadd.f32 %v381, %v570
        %v592 = vadd.f32 %v382, %v572
        %v593 = vadd.f32 %v383, %v575
        %v594 = vadd.f32 %v384, %v577
        %595 = vst [vmem:[%s257] sm:$0xff] %v579
        %596 = vst [vmem:[%s257 + $0x8] sm:$0xff] %v580
        %597 = vst [vmem:[%s257 + $0x10] sm:$0xff] %v581
        %598 = vst [vmem:[%s257 + $0x18] sm:$0xff] %v582
        %599 = vst [vmem:[%s257 + $0x20] sm:$0xff] %v583
        %600 = vst [vmem:[%s257 + $0x28] sm:$0xff] %v584
        %601 = vst [vmem:[%s257 + $0x30] sm:$0xff] %v585
        %602 = vst [vmem:[%s257 + $0x38] sm:$0xff] %v586
        %603 = vst [vmem:[%s257 + $0x40] sm:$0xff] %v587
        %604 = vst [vmem:[%s257 + $0x48] sm:$0xff] %v588
        %605 = vst [vmem:[%s257 + $0x50] sm:$0xff] %v589
        %606 = vst [vmem:[%s257 + $0x58] sm:$0xff] %v590
        %607 = vst [vmem:[%s257 + $0x60] sm:$0xff] %v591
        %608 = vst [vmem:[%s257 + $0x68] sm:$0xff] %v592
        %609 = vst [vmem:[%s257 + $0x70] sm:$0xff] %v593
        %610 = vst [vmem:[%s257 + $0x78] sm:$0xff] %v594
        %s611 = smul.u32 16, %s23
        %p612 = scmp.lt.s32.totalorder %s611, 31
        %s613 = scalar_select %p612, %s611, 31
        %p614 = scmp.lt.s32.totalorder %s22, 0
        %s615 = scalar_select %p614, %s22, 0
        %s616 = sadd.s32 %s615, %s613
        %s617 = smul.addr %s616, 8
        %s618 = scalar_lea.vmem %s3, %s617
        // Predicated region
        $region41: #{graph_convolution.3} parent=31 // pred_check
          %p619 = pneg %p136
        $region42: #{graph_convolution.3} parent=31 // pred_check_branch
          %621 = sbr.rel (%p619) target = $region44
        $region43: #{graph_convolution.3} parent=31 // pred_region
          %s622 = smul.u32 16, %s23
        $region44: #{graph_convolution.3} parent=31 // pred_fallthru
          _
      $region32: #{graph_convolution.3} parent=5 // pred_fallthru
        _
      %p623 = scmp.le.s32.totalorder 2, %s12
      // Predicated region
      $region45: #{graph_convolution.3} parent=5 // pred_check
        %p624 = pneg %p623
      $region46: #{graph_convolution.3} parent=5 // pred_check_branch
        %626 = sbr.rel (%p624) target = $region48
      $region47: #{graph_convolution.3} parent=5 // pred_region
        %s627 = ssub.s32 %s12, 2
        // Predicated region
        $region49: #{graph_convolution.3} parent=47 // pred_check
          %p628 = pneg %p142
        $region50: #{graph_convolution.3} parent=47 // pred_check_branch
          %630 = sbr.rel (%p628) target = $region52
        $region51: #{graph_convolution.3} parent=47 // pred_region
          %s631 = smul.u32 16, %s26
          %p632 = scmp.lt.s32.totalorder %s631, 31
          %s633 = scalar_select %p632, %s631, 31
          %p634 = scmp.lt.s32.totalorder %s25, 0
          %s635 = scalar_select %p634, %s25, 0
          %s636 = sadd.s32 %s635, %s633
          %s637 = smul.addr %s636, 8
          %s638 = scalar_lea.vmem %s3, %s637
        $region52: #{graph_convolution.3} parent=47 // pred_fallthru
          _
      $region48: #{graph_convolution.3} parent=5 // pred_fallthru
        _
    $region6: #{graph_convolution.3} parent=1 // loop_footer
      %s16 = sadd.s32 1, %s12
    $region7: #{graph_convolution.3} parent=1 // loop_footer_branch
      %11 = sbr.rel target = $region3
    $region8: #{graph_convolution.3} parent=1 // loop_exit
      _
    %639 = vsyncpa [#allocation3], 1
    %s640 = scalar_lea.sflag [#allocation3], 1
    %641 = vsyncpa %s640, 1

</llo_original>
